<compile_context>
chip_gen: v6e
topology: v6e:2x2x1
jax: 0.10.0
libtpu: 0.0.40
codegen_flags: <defaults>
</compile_context>

<pallas_src>
import functools

import jax
import jax.numpy as jnp
import numpy as np
from jax.experimental import pallas as pl
from jax.experimental.pallas import tpu as pltpu

LANE = 128  # TPU lane width; every feature dim is zero-padded to this.

# Weight slab row-offsets (in units of LANE rows) inside w_all[896, 128]:
#   0: w_g1   1: w_g2   2..3: w_l1 (stacked 256)   4: w_enc   5..6: w_h (stacked 256)
W_G1, W_G2, W_L1, W_ENC, W_H = 0, 1, 2, 4, 5
# Row indices into the packed bias buffer b_all[8, LANE].
B_G1, B_G2, B_L1, B_ENC, B_HD = range(5)


def make_net_kernel(N, Bp, hidden_size):
    """Kernel factory; N / Bp / hidden_size are static layout constants."""
    A_OFF, X_OFF = 0, N
    SEL_OFF, PF_OFF = 2 * N, 2 * N + Bp

    def net_fwd_kernel(acts_ref, w_ref, b_ref, out_ref):
        f32 = jnp.float32
        bf16 = jnp.bfloat16

        def mm(lhs, rhs):
            # bf16 MXU operands, f32 accumulation.
            return jnp.dot(lhs.astype(bf16), rhs.astype(bf16),
                           preferred_element_type=f32)

        # --- unpack the single activation slab ---------------------------------
        a = acts_ref[pl.ds(A_OFF, N), pl.ds(0, N)]        # [N, N]   D^-1/2(A+I)D^-1/2
        x = acts_ref[pl.ds(X_OFF, N), :]                  # [N, 128] node features
        sel = acts_ref[pl.ds(SEL_OFF, Bp), pl.ds(0, N)]   # [Bp, N]  first-node one-hot
        pf = acts_ref[pl.ds(PF_OFF, Bp), :]               # [Bp, 128] pair_feature

        # --- unpack the single weight slab (stacked slabs = zero-copy K=256) ---
        w_g1 = w_ref[pl.ds(W_G1 * LANE, LANE), :]
        w_g2 = w_ref[pl.ds(W_G2 * LANE, LANE), :]
        w_l1 = w_ref[pl.ds(W_L1 * LANE, 2 * LANE), :]     # [256, 128]
        w_enc = w_ref[pl.ds(W_ENC * LANE, LANE), :]
        w_h = w_ref[pl.ds(W_H * LANE, 2 * LANE), :]       # [256, 128]
        b = b_ref[...]                                     # [8, 128] f32

        # --- Line graph encoder: 2x GCNConv + tanh (dropout(0.25) == identity) -
        h1 = jnp.tanh(mm(a, mm(x, w_g1)) + b[B_G1:B_G1 + 1, :])
        h2 = jnp.tanh(mm(a, mm(h1, w_g2)) + b[B_G2:B_G2 + 1, :])
        # Padded lanes stay exactly zero through tanh (tanh(0) == 0).

        # --- Graph readout + linear1, fused over the concat (K = 256) ----------
        cat12 = jnp.concatenate([h1, h2], axis=-1)        # [N, 256]
        g12 = mm(sel, cat12)                              # [Bp, 256] = [g1 | g2]
        hidden2 = mm(g12, w_l1) + b[B_L1:B_L1 + 1, :]     # [Bp, 128]

        # --- Expression encoder (substituted linear projection) ----------------
        hidden1 = mm(pf, w_enc) + b[B_ENC:B_ENC + 1, :]   # [Bp, 128]

        h1r = jnp.maximum(hidden1, 0.0)                   # relu(hidden1)
        h2r = jnp.maximum(hidden2, 0.0)                   # relu(hidden2)

        # --- Fused heads (K = 256): packed at lanes hidden..hidden+2 -----------
        #   lane hs   : logits  = linear2(relu(cat(hidden1, hidden2)))
        #   lane hs+1 : logits1 = logits1(relu(hidden1))
        #   lane hs+2 : logits2 = logits2(relu(hidden2))
        cat_r = jnp.concatenate([h1r, h2r], axis=-1)      # [Bp, 256]
        z = mm(cat_r, w_h) + b[B_HD:B_HD + 1, :]          # [Bp, 128]
        heads = pl.reciprocal(1.0 + jnp.exp(-z), approx=True)   # sigmoid (EUP)

        # Single lane-dense [Bp, 128] output vreg: relu(hidden2) with the three
        # head values spliced into lanes hidden_size..hidden_size+2.
        lane = jax.lax.broadcasted_iota(jnp.int32, (Bp, LANE), 1)
        head_mask = (lane >= hidden_size) & (lane < hidden_size + 3)
        out_ref[...] = jnp.where(head_mask, heads, h2r)

    return net_fwd_kernel


def net_forward(acts_packed, w_all, b_all, *, N, Bp, B, hidden_size):
    vmem = pl.BlockSpec(memory_space=pltpu.MemorySpace.VMEM)

    flops = 2 * (2 * N * LANE * LANE          # x@Wg1, h1@Wg2
                 + 2 * N * N * LANE           # two adjacency aggregations
                 + Bp * N * 2 * LANE          # fused readout (K=N, width 256)
                 + 2 * Bp * 2 * LANE * LANE   # fused linear1 + fused heads (K=256)
                 + Bp * LANE * LANE)          # expression-encoder projection
    transcendentals = 2 * N * LANE + 2 * Bp * LANE       # tanh x2, exp + recip
    inputs = (acts_packed, w_all, b_all)
    bytes_accessed = int(sum(int(t.size) * t.dtype.itemsize for t in inputs)
                         + Bp * LANE * 4)

    out = pl.pallas_call(
        make_net_kernel(N, Bp, hidden_size),
        out_shape=jax.ShapeDtypeStruct((Bp, LANE), jnp.float32),
        in_specs=[vmem, vmem, vmem],
        out_specs=vmem,
        cost_estimate=pl.CostEstimate(flops=flops,
                                      transcendentals=transcendentals,
                                      bytes_accessed=bytes_accessed),
    )(acts_packed, w_all, b_all)

    logits = out[:B, hidden_size]
    logits1 = out[:B, hidden_size + 1]
    logits2 = out[:B, hidden_size + 2]
    hidden2 = out[:B, :hidden_size]            # post-ReLU, as in the module
    return logits, logits1, logits2, hidden2


def bce(p, y):
    eps = 1e-12
    p = jnp.clip(p, eps, 1.0 - eps)
    return -jnp.mean(y * jnp.log(p) + (1.0 - y) * jnp.log(1.0 - p))


def make_forward_and_loss(*, N, Bp, B, hidden_size, alpha, beta):
    """One jitted graph: pallas_call + BCE/accuracy glue (no per-op dispatch)."""
    fwd = functools.partial(net_forward, N=N, Bp=Bp, B=B, hidden_size=hidden_size)

    @jax.jit
    def forward_and_loss(acts_packed, w_all, b_all, y):
        logits, logits1, logits2, hidden2 = fwd(acts_packed, w_all, b_all)
        loss_1 = bce(logits1, y)
        loss_2 = bce(logits2, y)
        loss_3 = bce(logits, y)
        loss = alpha * loss_1 + beta * loss_2 + loss_3
        pred = logits > 0.7
        acc = jnp.mean((pred == (y > 0.5)).astype(jnp.float32))
        return logits, loss, acc, loss_1, loss_2, loss_3, hidden2

    return forward_and_loss


# -------------------------- host-side packing helpers --------------------------

def make_packed_params(key, input_dim1, input_dim2, latent_dim, hidden_size, d_model):
    assert hidden_size + 3 <= LANE
    ks = jax.random.split(key, 14)

    def w(k, shape):
        return np.asarray(0.1 * jax.random.normal(k, shape), dtype=np.float32)

    L0, L1 = latent_dim
    # GCNConv weights (in, out) + bias
    w_g1 = w(ks[0], (input_dim2, L0)); b_g1 = w(ks[1], (1, L0))
    w_g2 = w(ks[2], (L0, L1));         b_g2 = w(ks[3], (1, L1))
    # linear1: (L0+L1) -> hidden, split along its input axis (stacked slabs)
    wl1 = w(ks[4], (L0 + L1, hidden_size))
    w_l1a, w_l1b = wl1[:L0], wl1[L0:]
    b_l1 = w(ks[5], (1, hidden_size))
    # expression encoder substitute: input_dim1 -> d_model
    w_enc = w(ks[6], (input_dim1, d_model)); b_enc = w(ks[7], (1, d_model))
    # linear2: (d_model + hidden) -> 1, split along its input axis
    wl2 = w(ks[8], (d_model + hidden_size, 1)); b_l2 = w(ks[9], (1, 1))
    w_l2a, w_l2b = wl2[:d_model], wl2[d_model:]
    # logits heads
    w_log1 = w(ks[10], (d_model, 1)); b_log1 = w(ks[11], (1, 1))
    w_log2 = w(ks[12], (hidden_size, 1)); b_log2 = w(ks[13], (1, 1))

    hs = hidden_size
    # Fused heads packed at output lanes hs..hs+2 (so the kernel's [Bp,128]
    # output slab holds relu(hidden2) in lanes 0..hs-1 and heads in hs..hs+2).
    w_h_a = np.zeros((d_model, LANE), np.float32)
    w_h_a[:, hs] = w_l2a[:, 0]
    w_h_a[:, hs + 1] = w_log1[:, 0]
    w_h_b = np.zeros((hidden_size, LANE), np.float32)
    w_h_b[:, hs] = w_l2b[:, 0]
    w_h_b[:, hs + 2] = w_log2[:, 0]
    b_hd = np.zeros((1, LANE), np.float32)
    b_hd[0, hs] = b_l2[0, 0]
    b_hd[0, hs + 1] = b_log1[0, 0]
    b_hd[0, hs + 2] = b_log2[0, 0]

    # One flat, 128-lane-padded bf16 weight buffer (single input DMA); slab
    # order keeps (w_l1a, w_l1b) and (w_h_a, w_h_b) adjacent so the kernel can
    # take zero-copy 256-row slices for the fused K=256 matmuls.
    slabs = [w_g1, w_g2, w_l1a, w_l1b, w_enc, w_h_a, w_h_b]
    w_all = np.zeros((len(slabs) * LANE, LANE), np.float32)
    for i, m in enumerate(slabs):
        w_all[i * LANE: i * LANE + m.shape[0], : m.shape[1]] = m

    # One packed f32 bias buffer (biases added post-accumulation).
    b_all = np.zeros((8, LANE), np.float32)
    for i, bvec in enumerate([b_g1, b_g2, b_l1, b_enc, b_hd]):
        b_all[i, : bvec.shape[1]] = bvec[0]

    return jnp.asarray(w_all, dtype=jnp.bfloat16), jnp.asarray(b_all)


def build_graph(num_graphs, nodes_per_graph):
    """Ring graph inside each example; returns normalized dense adjacency and
    the first-node one-hot selector (numpy, f32)."""
    N = num_graphs * nodes_per_graph
    A = np.zeros((N, N), dtype=np.float32)
    for g in range(num_graphs):
        base = g * nodes_per_graph
        for i in range(nodes_per_graph):
            j = (i + 1) % nodes_per_graph
            A[base + i, base + j] = 1.0
            A[base + j, base + i] = 1.0
    A_hat = A + np.eye(N, dtype=np.float32)              # self loops (GCNConv default)
    deg = A_hat.sum(axis=1)
    dinv = 1.0 / np.sqrt(deg)
    A_norm = (dinv[:, None] * A_hat) * dinv[None, :]     # D^-1/2 (A+I) D^-1/2
    sel = np.zeros((num_graphs, N), dtype=np.float32)
    for g in range(num_graphs):
        sel[g, g * nodes_per_graph] = 1.0                # first node of each graph
    return A_norm, sel


def pack_acts(a_norm, x, sel, pair_feature, *, N, Bp):
    """Pack the four small activation inputs into one lane-padded bf16 slab:
       rows [0,N)       : normalized adjacency (lanes 0..N-1)
       rows [N,2N)      : node features        (lanes 0..F-1)
       rows [2N,2N+Bp)  : first-node selector  (lanes 0..N-1, rows B..Bp-1 zero)
       rows [2N+Bp,...) : pair_feature         (lanes 0..F1-1, rows B..Bp-1 zero)
    All segment offsets are multiples of 8 (sublane-aligned)."""
    assert N % 8 == 0 and Bp % 8 == 0
    buf = np.zeros((2 * N + 2 * Bp, LANE), np.float32)
    buf[0:N, 0:N] = a_norm
    buf[N:2 * N, 0:x.shape[1]] = x
    buf[2 * N:2 * N + sel.shape[0], 0:N] = sel
    buf[2 * N + Bp:2 * N + Bp + pair_feature.shape[0], 0:pair_feature.shape[1]] = pair_feature
    return jnp.asarray(buf, dtype=jnp.bfloat16)


if __name__ == "__main__":
    # Small shapes consistent with the module's forward.
    num_graphs = 4          # B
    nodes_per_graph = 4     # -> N = 16 line-graph nodes
    input_dim1 = 16         # pair_feature dim
    input_dim2 = 8          # node feature dim
    latent_dim = [32, 32]
    hidden_size = 32
    d_model = 16
    alpha, beta = 0.5, 0.5
    N = num_graphs * nodes_per_graph
    Bp = max(8, ((num_graphs + 7) // 8) * 8)   # sublane-padded batch rows

    key = jax.random.PRNGKey(0)
    k_par, k_x, k_pf, k_y = jax.random.split(key, 4)

    w_all, b_all = make_packed_params(k_par, input_dim1, input_dim2,
                                      latent_dim, hidden_size, d_model)
    a_norm_np, sel_np = build_graph(num_graphs, nodes_per_graph)

    x = jax.random.normal(k_x, (N, input_dim2), dtype=jnp.float32)          # data.x
    pair_feature = jax.random.normal(k_pf, (num_graphs, input_dim1), dtype=jnp.float32)
    y = jax.random.bernoulli(k_y, 0.5, (num_graphs,)).astype(jnp.float32)   # data.y

    acts_packed = pack_acts(a_norm_np, np.asarray(x), sel_np,
                            np.asarray(pair_feature), N=N, Bp=Bp)

    forward_and_loss = make_forward_and_loss(
        N=N, Bp=Bp, B=num_graphs, hidden_size=hidden_size, alpha=alpha, beta=beta)

    outs = forward_and_loss(acts_packed, w_all, b_all, y)
    jax.block_until_ready(outs)
    logits, loss, acc, loss_1, loss_2, loss_3, hidden2 = outs

    assert logits.shape == (num_graphs,)
    assert hidden2.shape == (num_graphs, hidden_size)
    assert np.isfinite(np.asarray(loss)) and np.isfinite(np.asarray(acc))
    print("KERNEL_OK")
</pallas_src>

<mosaic_0001>
module attributes {stable_mosaic.version = 11 : i64} {
  func.func @net_fwd_kernel(%arg0: memref<48x128xbf16, #tpu.memory_space<vmem>>, %arg1: memref<896x128xbf16, #tpu.memory_space<vmem>>, %arg2: memref<8x128xf32, #tpu.memory_space<vmem>>, %arg3: memref<8x128xf32, #tpu.memory_space<vmem>>) attributes {dimension_semantics = [], scalar_prefetch = 0 : i64, scratch_operands = 0 : i64, tpu.core_type = #tpu.core_type<tc>} {
    %c0 = arith.constant 0 : index
    %c0_0 = arith.constant 0 : index
    %0 = vector.load %arg0[%c0, %c0_0] : memref<48x128xbf16, #tpu.memory_space<vmem>>, vector<16x16xbf16>
    %c16 = arith.constant 16 : index
    %c0_1 = arith.constant 0 : index
    %1 = vector.load %arg0[%c16, %c0_1] : memref<48x128xbf16, #tpu.memory_space<vmem>>, vector<16x128xbf16>
    %c32 = arith.constant 32 : index
    %c0_2 = arith.constant 0 : index
    %2 = vector.load %arg0[%c32, %c0_2] : memref<48x128xbf16, #tpu.memory_space<vmem>>, vector<8x16xbf16>
    %c40 = arith.constant 40 : index
    %c0_3 = arith.constant 0 : index
    %3 = vector.load %arg0[%c40, %c0_3] : memref<48x128xbf16, #tpu.memory_space<vmem>>, vector<8x128xbf16>
    %c0_4 = arith.constant 0 : index
    %c0_5 = arith.constant 0 : index
    %4 = vector.load %arg1[%c0_4, %c0_5] : memref<896x128xbf16, #tpu.memory_space<vmem>>, vector<128x128xbf16>
    %c128 = arith.constant 128 : index
    %c0_6 = arith.constant 0 : index
    %5 = vector.load %arg1[%c128, %c0_6] : memref<896x128xbf16, #tpu.memory_space<vmem>>, vector<128x128xbf16>
    %c256 = arith.constant 256 : index
    %c0_7 = arith.constant 0 : index
    %6 = vector.load %arg1[%c256, %c0_7] : memref<896x128xbf16, #tpu.memory_space<vmem>>, vector<256x128xbf16>
    %c512 = arith.constant 512 : index
    %c0_8 = arith.constant 0 : index
    %7 = vector.load %arg1[%c512, %c0_8] : memref<896x128xbf16, #tpu.memory_space<vmem>>, vector<128x128xbf16>
    %c640 = arith.constant 640 : index
    %c0_9 = arith.constant 0 : index
    %8 = vector.load %arg1[%c640, %c0_9] : memref<896x128xbf16, #tpu.memory_space<vmem>>, vector<256x128xbf16>
    %c0_10 = arith.constant 0 : index
    %c0_11 = arith.constant 0 : index
    %9 = vector.load %arg2[%c0_10, %c0_11] : memref<8x128xf32, #tpu.memory_space<vmem>>, vector<8x128xf32>
    %cst = arith.constant dense<0.000000e+00> : vector<16x128xf32>
    %10 = tpu.matmul %1, %4, %cst {dimension_numbers = #tpu.dot_dimension_numbers<[1], [0], [0], [1], [0, 0, 1, 1], [], []>} : vector<16x128xbf16>, vector<128x128xbf16>, vector<16x128xf32> -> vector<16x128xf32>
    %11 = arith.truncf %10 : vector<16x128xf32> to vector<16x128xbf16>
    %cst_12 = arith.constant dense<0.000000e+00> : vector<16x128xf32>
    %12 = tpu.matmul %0, %11, %cst_12 {dimension_numbers = #tpu.dot_dimension_numbers<[1], [0], [0], [1], [0, 0, 1, 1], [], []>} : vector<16x16xbf16>, vector<16x128xbf16>, vector<16x128xf32> -> vector<16x128xf32>
    %13 = vector.extract_strided_slice %9 {offsets = [0, 0], sizes = [1, 128], strides = [1, 1]} : vector<8x128xf32> to vector<1x128xf32>
    %14 = vector.broadcast %13 : vector<1x128xf32> to vector<16x128xf32>
    %15 = arith.addf %12, %14 : vector<16x128xf32>
    %16 = math.tanh %15 : vector<16x128xf32>
    %17 = arith.truncf %16 : vector<16x128xf32> to vector<16x128xbf16>
    %cst_13 = arith.constant dense<0.000000e+00> : vector<16x128xf32>
    %18 = tpu.matmul %17, %5, %cst_13 {dimension_numbers = #tpu.dot_dimension_numbers<[1], [0], [0], [1], [0, 0, 1, 1], [], []>} : vector<16x128xbf16>, vector<128x128xbf16>, vector<16x128xf32> -> vector<16x128xf32>
    %19 = arith.truncf %18 : vector<16x128xf32> to vector<16x128xbf16>
    %cst_14 = arith.constant dense<0.000000e+00> : vector<16x128xf32>
    %20 = tpu.matmul %0, %19, %cst_14 {dimension_numbers = #tpu.dot_dimension_numbers<[1], [0], [0], [1], [0, 0, 1, 1], [], []>} : vector<16x16xbf16>, vector<16x128xbf16>, vector<16x128xf32> -> vector<16x128xf32>
    %21 = vector.extract_strided_slice %9 {offsets = [1, 0], sizes = [1, 128], strides = [1, 1]} : vector<8x128xf32> to vector<1x128xf32>
    %22 = vector.broadcast %21 : vector<1x128xf32> to vector<16x128xf32>
    %23 = arith.addf %20, %22 : vector<16x128xf32>
    %24 = math.tanh %23 : vector<16x128xf32>
    %25 = tpu.concatenate %16, %24 in 1 : vector<16x128xf32>, vector<16x128xf32> -> vector<16x256xf32>
    %26 = arith.truncf %25 : vector<16x256xf32> to vector<16x256xbf16>
    %cst_15 = arith.constant dense<0.000000e+00> : vector<8x256xf32>
    %27 = tpu.matmul %2, %26, %cst_15 {dimension_numbers = #tpu.dot_dimension_numbers<[1], [0], [0], [1], [0, 0, 1, 1], [], []>} : vector<8x16xbf16>, vector<16x256xbf16>, vector<8x256xf32> -> vector<8x256xf32>
    %28 = arith.truncf %27 : vector<8x256xf32> to vector<8x256xbf16>
    %cst_16 = arith.constant dense<0.000000e+00> : vector<8x128xf32>
    %29 = tpu.matmul %28, %6, %cst_16 {dimension_numbers = #tpu.dot_dimension_numbers<[1], [0], [0], [1], [0, 0, 1, 1], [], []>} : vector<8x256xbf16>, vector<256x128xbf16>, vector<8x128xf32> -> vector<8x128xf32>
    %30 = vector.extract_strided_slice %9 {offsets = [2, 0], sizes = [1, 128], strides = [1, 1]} : vector<8x128xf32> to vector<1x128xf32>
    %31 = vector.broadcast %30 : vector<1x128xf32> to vector<8x128xf32>
    %32 = arith.addf %29, %31 : vector<8x128xf32>
    %cst_17 = arith.constant dense<0.000000e+00> : vector<8x128xf32>
    %33 = tpu.matmul %3, %7, %cst_17 {dimension_numbers = #tpu.dot_dimension_numbers<[1], [0], [0], [1], [0, 0, 1, 1], [], []>} : vector<8x128xbf16>, vector<128x128xbf16>, vector<8x128xf32> -> vector<8x128xf32>
    %34 = vector.extract_strided_slice %9 {offsets = [3, 0], sizes = [1, 128], strides = [1, 1]} : vector<8x128xf32> to vector<1x128xf32>
    %35 = vector.broadcast %34 : vector<1x128xf32> to vector<8x128xf32>
    %36 = arith.addf %33, %35 : vector<8x128xf32>
    %cst_18 = arith.constant 0.000000e+00 : f32
    %37 = vector.broadcast %cst_18 : f32 to vector<8x128xf32>
    %38 = arith.maximumf %36, %37 : vector<8x128xf32>
    %cst_19 = arith.constant 0.000000e+00 : f32
    %39 = vector.broadcast %cst_19 : f32 to vector<8x128xf32>
    %40 = arith.maximumf %32, %39 : vector<8x128xf32>
    %41 = tpu.concatenate %38, %40 in 1 : vector<8x128xf32>, vector<8x128xf32> -> vector<8x256xf32>
    %42 = arith.truncf %41 : vector<8x256xf32> to vector<8x256xbf16>
    %cst_20 = arith.constant dense<0.000000e+00> : vector<8x128xf32>
    %43 = tpu.matmul %42, %8, %cst_20 {dimension_numbers = #tpu.dot_dimension_numbers<[1], [0], [0], [1], [0, 0, 1, 1], [], []>} : vector<8x256xbf16>, vector<256x128xbf16>, vector<8x128xf32> -> vector<8x128xf32>
    %44 = vector.extract_strided_slice %9 {offsets = [4, 0], sizes = [1, 128], strides = [1, 1]} : vector<8x128xf32> to vector<1x128xf32>
    %45 = vector.broadcast %44 : vector<1x128xf32> to vector<8x128xf32>
    %46 = arith.addf %43, %45 : vector<8x128xf32>
    %cst_21 = arith.constant 0.000000e+00 : f32
    %47 = vector.broadcast %cst_21 : f32 to vector<8x128xf32>
    %48 = arith.subf %47, %46 : vector<8x128xf32>
    %49 = math.exp %48 : vector<8x128xf32>
    %cst_22 = arith.constant 1.000000e+00 : f32
    %50 = vector.broadcast %cst_22 : f32 to vector<8x128xf32>
    %51 = arith.addf %50, %49 : vector<8x128xf32>
    %52 = tpu.reciprocal %51 {approx = true} : vector<8x128xf32> -> vector<8x128xf32>
    %53 = tpu.iota {dimensions = array<i32: 1>} : vector<8x128xi32>
    %c32_i32 = arith.constant 32 : i32
    %54 = vector.broadcast %c32_i32 : i32 to vector<8x128xi32>
    %55 = arith.cmpi sge, %53, %54 : vector<8x128xi32>
    %c35_i32 = arith.constant 35 : i32
    %56 = vector.broadcast %c35_i32 : i32 to vector<8x128xi32>
    %57 = arith.cmpi slt, %53, %56 : vector<8x128xi32>
    %58 = arith.andi %55, %57 : vector<8x128xi1>
    %59 = arith.select %58, %52, %40 : vector<8x128xi1>, vector<8x128xf32>
    %c0_23 = arith.constant 0 : index
    %c0_24 = arith.constant 0 : index
    %60 = vector.load %arg3[%c0_23, %c0_24] : memref<8x128xf32, #tpu.memory_space<vmem>>, vector<8x128xf32>
    tpu.vector_store %arg3[%c0_23, %c0_24], %59 {strides = array<i32>} : memref<8x128xf32, #tpu.memory_space<vmem>>, vector<8x128xf32>,
    return
  }
}

</mosaic_0001>

<llo_original>
// kernel: forward_and_loss.1
$region0: #{forward_and_loss.1}
  #allocation0 [shape = 'u32[]', space=smem, size = 0x4, offset = 0x4, fixed_abs, tag = 'smem constant byte address 0x4 - core index']
  #allocation1 [shape = 'u32[144,128]{1,0:T(1,128)}', space=vmem, size = 0x12000, scoped, tag = 'internal scratch']
  %s0 = inlined_call_operand.hbm [shape: bf16[48,128], index: 0, kind: input, shape index: {}]
  %s1 = inlined_call_operand.hbm [shape: bf16[896,128], index: 1, kind: input, shape index: {}]
  %s2 = inlined_call_operand.hbm [shape: f32[8,128], index: 2, kind: input, shape index: {}]
  %s3 = inlined_call_operand.vmem [shape: f32[8,128], index: 3, kind: output, shape index: {}]
  %s4 = sld [smem:[#allocation0]]
  $region34: #{forward_and_loss.1} parent=0
    _
  %s6 = ssub.s32 1, %s4
  %s7 = scalar_select 0, %s6, %s4
  $region1: #{forward_and_loss.1} parent=0
    #allocation2 [shape = 'u8[12288]{0}', space=vmem, size = 0x3000, scoped, tag = 'input window, operand 0, single buffered']
    #allocation3 [shape = 's32[1]{0}', space=sflag, size = 0x4, scoped, tag = 'scoped memory for forward_and_loss.1']
    #allocation4 [shape = 'u8[229376]{0}', space=vmem, size = 0x38000, scoped, tag = 'input window, operand 1, single buffered']
    #allocation5 [shape = 's32[1]{0}', space=sflag, size = 0x4, scoped, tag = 'scoped memory for forward_and_loss.1']
    #allocation6 [shape = 'u8[4096]{0}', space=vmem, size = 0x1000, scoped, tag = 'input window, operand 2, single buffered']
    %8 = vsyncpa [#allocation3], 0
    %9 = vsyncpa [#allocation5], 0
    // Predicated region
    $region2: #{forward_and_loss.1} parent=1 // pred_check
      _
    $region3: #{forward_and_loss.1} parent=1 // pred_check_branch
      %11 = sbr.rel (0) target = $region5
    $region4: #{forward_and_loss.1} parent=1 // pred_region
      %s13 = ssub.s32 384, 384
      %14 = vsyncadd [#allocation3], %s13
      %s15 = sshll.u32 [#allocation2], 4
      %s16 = int_to_ptr.vmem [resolvable:$true] %s15
      %21 = dma.hbm_to_vmem [thread:$0]  %s0, 384, %s16, [#allocation3], 64, 64, 4
    $region5: #{forward_and_loss.1} parent=1 // pred_fallthru
      _
    // Predicated region
    $region6: #{forward_and_loss.1} parent=1 // pred_check
      _
    $region7: #{forward_and_loss.1} parent=1 // pred_check_branch
      %23 = sbr.rel (0) target = $region9
    $region8: #{forward_and_loss.1} parent=1 // pred_region
      %s25 = ssub.s32 7168, 7168
      %26 = vsyncadd [#allocation5], %s25
      %s27 = sshll.u32 [#allocation4], 4
      %s28 = int_to_ptr.vmem [resolvable:$true] %s27
      %33 = dma.hbm_to_vmem [thread:$0]  %s1, 7168, %s28, [#allocation5], 64, 64, 4
    $region9: #{forward_and_loss.1} parent=1 // pred_fallthru
      _
    // Predicated region
    $region10: #{forward_and_loss.1} parent=1 // pred_check
      _
    $region11: #{forward_and_loss.1} parent=1 // pred_check_branch
      %35 = sbr.rel (0) target = $region13
    $region12: #{forward_and_loss.1} parent=1 // pred_region
      %s37 = ssub.s32 128, 128
      %38 = vsyncadd [#allocation5], %s37
      %s40 = sshll.u32 [#allocation6], 4
      %s41 = int_to_ptr.vmem [resolvable:$true] %s40
      %43 = dma.hbm_to_vmem [thread:$0]  %s2, 128, %s41, [#allocation5]
    $region13: #{forward_and_loss.1} parent=1 // pred_fallthru
      _
    // Predicated region
    $region14: #{forward_and_loss.1} parent=1 // pred_check
      _
    $region15: #{forward_and_loss.1} parent=1 // pred_check_branch
      %45 = sbr.rel (0) target = $region17
    $region16: #{forward_and_loss.1} parent=1 // pred_region
      %46 = dma.done [#allocation3], 384
    $region17: #{forward_and_loss.1} parent=1 // pred_fallthru
      _
    // Predicated region
    $region18: #{forward_and_loss.1} parent=1 // pred_check
      _
    $region19: #{forward_and_loss.1} parent=1 // pred_check_branch
      %48 = sbr.rel (0) target = $region21
    $region20: #{forward_and_loss.1} parent=1 // pred_region
      %49 = dma.done [#allocation5], 7168
    $region21: #{forward_and_loss.1} parent=1 // pred_fallthru
      _
    // Predicated region
    $region22: #{forward_and_loss.1} parent=1 // pred_check
      _
    $region23: #{forward_and_loss.1} parent=1 // pred_check_branch
      %51 = sbr.rel (0) target = $region25
    $region24: #{forward_and_loss.1} parent=1 // pred_region
      %52 = dma.done [#allocation5], 128
    $region25: #{forward_and_loss.1} parent=1 // pred_fallthru
      _
    %v54 = vld [vmem:[#allocation2] sm:$0xf]
    %v55 = vld [vmem:[#allocation2 + $0x4] sm:$0xf]
    %v56 = vld [vmem:[#allocation2 + $0x8] sm:$0xf]
    %v57 = vld [vmem:[#allocation2 + $0xc] sm:$0xf]
    %v58 = vld [vmem:[#allocation2 + $0x10] sm:$0xf]
    %v59 = vld [vmem:[#allocation2 + $0x14] sm:$0xf]
    %v60 = vld [vmem:[#allocation4] sm:$0xf]
    %v61 = vld [vmem:[#allocation4 + $0x4] sm:$0xf]
    %v62 = vld [vmem:[#allocation4 + $0x8] sm:$0xf]
    %v63 = vld [vmem:[#allocation4 + $0xc] sm:$0xf]
    %v64 = vld [vmem:[#allocation4 + $0x10] sm:$0xf]
    %v65 = vld [vmem:[#allocation4 + $0x14] sm:$0xf]
    %v66 = vld [vmem:[#allocation4 + $0x18] sm:$0xf]
    %v67 = vld [vmem:[#allocation4 + $0x1c] sm:$0xf]
    %v68 = vld [vmem:[#allocation4 + $0x20] sm:$0xf]
    %v69 = vld [vmem:[#allocation4 + $0x24] sm:$0xf]
    %v70 = vld [vmem:[#allocation4 + $0x28] sm:$0xf]
    %v71 = vld [vmem:[#allocation4 + $0x2c] sm:$0xf]
    %v72 = vld [vmem:[#allocation4 + $0x30] sm:$0xf]
    %v73 = vld [vmem:[#allocation4 + $0x34] sm:$0xf]
    %v74 = vld [vmem:[#allocation4 + $0x38] sm:$0xf]
    %v75 = vld [vmem:[#allocation4 + $0x3c] sm:$0xf]
    %v76 = vld [vmem:[#allocation4 + $0x40] sm:$0xf]
    %v77 = vld [vmem:[#allocation4 + $0x44] sm:$0xf]
    %v78 = vld [vmem:[#allocation4 + $0x48] sm:$0xf]
    %v79 = vld [vmem:[#allocation4 + $0x4c] sm:$0xf]
    %v80 = vld [vmem:[#allocation4 + $0x50] sm:$0xf]
    %v81 = vld [vmem:[#allocation4 + $0x54] sm:$0xf]
    %v82 = vld [vmem:[#allocation4 + $0x58] sm:$0xf]
    %v83 = vld [vmem:[#allocation4 + $0x5c] sm:$0xf]
    %v84 = vld [vmem:[#allocation4 + $0x60] sm:$0xf]
    %v85 = vld [vmem:[#allocation4 + $0x64] sm:$0xf]
    %v86 = vld [vmem:[#allocation4 + $0x68] sm:$0xf]
    %v87 = vld [vmem:[#allocation4 + $0x6c] sm:$0xf]
    %v88 = vld [vmem:[#allocation4 + $0x70] sm:$0xf]
    %v89 = vld [vmem:[#allocation4 + $0x74] sm:$0xf]
    %v90 = vld [vmem:[#allocation4 + $0x78] sm:$0xf]
    %v91 = vld [vmem:[#allocation4 + $0x7c] sm:$0xf]
    %v92 = vld [vmem:[#allocation4 + $0x80] sm:$0xf]
    %v93 = vld [vmem:[#allocation4 + $0x84] sm:$0xf]
    %v94 = vld [vmem:[#allocation4 + $0x88] sm:$0xf]
    %v95 = vld [vmem:[#allocation4 + $0x8c] sm:$0xf]
    %v96 = vld [vmem:[#allocation4 + $0x90] sm:$0xf]
    %v97 = vld [vmem:[#allocation4 + $0x94] sm:$0xf]
    %v98 = vld [vmem:[#allocation4 + $0x98] sm:$0xf]
    %v99 = vld [vmem:[#allocation4 + $0x9c] sm:$0xf]
    %v100 = vld [vmem:[#allocation4 + $0xa0] sm:$0xf]
    %v101 = vld [vmem:[#allocation4 + $0xa4] sm:$0xf]
    %v102 = vld [vmem:[#allocation4 + $0xa8] sm:$0xf]
    %v103 = vld [vmem:[#allocation4 + $0xac] sm:$0xf]
    %v104 = vld [vmem:[#allocation4 + $0xb0] sm:$0xf]
    %v105 = vld [vmem:[#allocation4 + $0xb4] sm:$0xf]
    %v106 = vld [vmem:[#allocation4 + $0xb8] sm:$0xf]
    %v107 = vld [vmem:[#allocation4 + $0xbc] sm:$0xf]
    %v108 = vld [vmem:[#allocation4 + $0xc0] sm:$0xf]
    %v109 = vld [vmem:[#allocation4 + $0xc4] sm:$0xf]
    %v110 = vld [vmem:[#allocation4 + $0xc8] sm:$0xf]
    %v111 = vld [vmem:[#allocation4 + $0xcc] sm:$0xf]
    %v112 = vld [vmem:[#allocation4 + $0xd0] sm:$0xf]
    %v113 = vld [vmem:[#allocation4 + $0xd4] sm:$0xf]
    %v114 = vld [vmem:[#allocation4 + $0xd8] sm:$0xf]
    %v115 = vld [vmem:[#allocation4 + $0xdc] sm:$0xf]
    %v116 = vld [vmem:[#allocation4 + $0xe0] sm:$0xf]
    %v117 = vld [vmem:[#allocation4 + $0xe4] sm:$0xf]
    %v118 = vld [vmem:[#allocation4 + $0xe8] sm:$0xf]
    %v119 = vld [vmem:[#allocation4 + $0xec] sm:$0xf]
    %v120 = vld [vmem:[#allocation4 + $0xf0] sm:$0xf]
    %v121 = vld [vmem:[#allocation4 + $0xf4] sm:$0xf]
    %v122 = vld [vmem:[#allocation4 + $0xf8] sm:$0xf]
    %v123 = vld [vmem:[#allocation4 + $0xfc] sm:$0xf]
    %v124 = vld [vmem:[#allocation4 + $0x100] sm:$0xf]
    %v125 = vld [vmem:[#allocation4 + $0x104] sm:$0xf]
    %v126 = vld [vmem:[#allocation4 + $0x108] sm:$0xf]
    %v127 = vld [vmem:[#allocation4 + $0x10c] sm:$0xf]
    %v128 = vld [vmem:[#allocation4 + $0x110] sm:$0xf]
    %v129 = vld [vmem:[#allocation4 + $0x114] sm:$0xf]
    %v130 = vld [vmem:[#allocation4 + $0x118] sm:$0xf]
    %v131 = vld [vmem:[#allocation4 + $0x11c] sm:$0xf]
    %v132 = vld [vmem:[#allocation4 + $0x120] sm:$0xf]
    %v133 = vld [vmem:[#allocation4 + $0x124] sm:$0xf]
    %v134 = vld [vmem:[#allocation4 + $0x128] sm:$0xf]
    %v135 = vld [vmem:[#allocation4 + $0x12c] sm:$0xf]
    %v136 = vld [vmem:[#allocation4 + $0x130] sm:$0xf]
    %v137 = vld [vmem:[#allocation4 + $0x134] sm:$0xf]
    %v138 = vld [vmem:[#allocation4 + $0x138] sm:$0xf]
    %v139 = vld [vmem:[#allocation4 + $0x13c] sm:$0xf]
    %v140 = vld [vmem:[#allocation4 + $0x140] sm:$0xf]
    %v141 = vld [vmem:[#allocation4 + $0x144] sm:$0xf]
    %v142 = vld [vmem:[#allocation4 + $0x148] sm:$0xf]
    %v143 = vld [vmem:[#allocation4 + $0x14c] sm:$0xf]
    %v144 = vld [vmem:[#allocation4 + $0x150] sm:$0xf]
    %v145 = vld [vmem:[#allocation4 + $0x154] sm:$0xf]
    %v146 = vld [vmem:[#allocation4 + $0x158] sm:$0xf]
    %v147 = vld [vmem:[#allocation4 + $0x15c] sm:$0xf]
    %v148 = vld [vmem:[#allocation4 + $0x160] sm:$0xf]
    %v149 = vld [vmem:[#allocation4 + $0x164] sm:$0xf]
    %v150 = vld [vmem:[#allocation4 + $0x168] sm:$0xf]
    %v151 = vld [vmem:[#allocation4 + $0x16c] sm:$0xf]
    %v152 = vld [vmem:[#allocation4 + $0x170] sm:$0xf]
    %v153 = vld [vmem:[#allocation4 + $0x174] sm:$0xf]
    %v154 = vld [vmem:[#allocation4 + $0x178] sm:$0xf]
    %v155 = vld [vmem:[#allocation4 + $0x17c] sm:$0xf]
    %v156 = vld [vmem:[#allocation4 + $0x180] sm:$0xf]
    %v157 = vld [vmem:[#allocation4 + $0x184] sm:$0xf]
    %v158 = vld [vmem:[#allocation4 + $0x188] sm:$0xf]
    %v159 = vld [vmem:[#allocation4 + $0x18c] sm:$0xf]
    %v160 = vld [vmem:[#allocation4 + $0x190] sm:$0xf]
    %v161 = vld [vmem:[#allocation4 + $0x194] sm:$0xf]
    %v162 = vld [vmem:[#allocation4 + $0x198] sm:$0xf]
    %v163 = vld [vmem:[#allocation4 + $0x19c] sm:$0xf]
    %v164 = vld [vmem:[#allocation4 + $0x1a0] sm:$0xf]
    %v165 = vld [vmem:[#allocation4 + $0x1a4] sm:$0xf]
    %v166 = vld [vmem:[#allocation4 + $0x1a8] sm:$0xf]
    %v167 = vld [vmem:[#allocation4 + $0x1ac] sm:$0xf]
    %v168 = vld [vmem:[#allocation4 + $0x1b0] sm:$0xf]
    %v169 = vld [vmem:[#allocation4 + $0x1b4] sm:$0xf]
    %v170 = vld [vmem:[#allocation4 + $0x1b8] sm:$0xf]
    %v171 = vld [vmem:[#allocation4 + $0x1bc] sm:$0xf]
    %v172 = vld [vmem:[#allocation6] sm:$0xff]
    %v175 = vunpack.c.l.b16 %v56
    %v176 = vunpack.c.l.b16 %v57
    %v177 = vpack.c.b16 %v176, %v175
    %v195 = vunpack.c.l.b16 %v60
    %v196 = vunpack.c.l.b16 %v61
    %v197 = vunpack.c.l.b16 %v62
    %v198 = vunpack.c.l.b16 %v63
    %v199 = vunpack.c.l.b16 %v64
    %v200 = vunpack.c.l.b16 %v65
    %v201 = vunpack.c.l.b16 %v66
    %v202 = vunpack.c.l.b16 %v67
    %v203 = vunpack.c.l.b16 %v68
    %v204 = vunpack.c.l.b16 %v69
    %v205 = vunpack.c.l.b16 %v70
    %v206 = vunpack.c.l.b16 %v71
    %v207 = vunpack.c.l.b16 %v72
    %v208 = vunpack.c.l.b16 %v73
    %v209 = vunpack.c.l.b16 %v74
    %v210 = vunpack.c.l.b16 %v75
    %v211 = vpack.c.b16 %v196, %v195
    %v212 = vpack.c.b16 %v198, %v197
    %v213 = vpack.c.b16 %v200, %v199
    %v214 = vpack.c.b16 %v202, %v201
    %v215 = vpack.c.b16 %v204, %v203
    %v216 = vpack.c.b16 %v206, %v205
    %v217 = vpack.c.b16 %v208, %v207
    %v218 = vpack.c.b16 %v210, %v209
    %227 = vmatprep.subr.bf16.mxu0 0
    %228 = vmatpush1.bf16.msra.mxu0 %v218
    %229 = vmatprep.subr.bf16.mxu0 0
    %230 = vmatpush1.bf16.msra.mxu0 %v217
    %231 = vmatprep.subr.bf16.mxu0 0
    %232 = vmatpush1.bf16.msra.mxu0 %v216
    %233 = vmatprep.subr.bf16.mxu0 0
    %234 = vmatpush1.bf16.msra.mxu0 %v215
    %235 = vmatprep.subr.bf16.mxu0 0
    %236 = vmatpush1.bf16.msra.mxu0 %v214
    %237 = vmatprep.subr.bf16.mxu0 0
    %238 = vmatpush1.bf16.msra.mxu0 %v213
    %239 = vmatprep.subr.bf16.mxu0 0
    %240 = vmatpush1.bf16.msra.mxu0 %v212
    %241 = vmatprep.subr.bf16.mxu0 0
    %242 = vmatpush1.bf16.msra.mxu0 %v211
    %243 = vmatprep.subr.bf16.mxu0 0
    %244 = vmatpush2.bf16.msra.mxu0 0
    %245 = vmatprep.subr.bf16.mxu0 0
    %246 = vmatpush2.bf16.msra.mxu0 0
    %247 = vmatprep.subr.bf16.mxu0 0
    %248 = vmatpush2.bf16.msra.mxu0 0
    %249 = vmatprep.subr.bf16.mxu0 0
    %250 = vmatpush2.bf16.msra.mxu0 0
    %251 = vmatprep.subr.bf16.mxu0 0
    %252 = vmatpush2.bf16.msra.mxu0 0
    %253 = vmatprep.subr.bf16.mxu0 0
    %254 = vmatpush2.bf16.msra.mxu0 0
    %255 = vmatprep.subr.bf16.mxu0 0
    %256 = vmatpush2.bf16.msra.mxu0 0
    %257 = vmatprep.subr.bf16.mxu0 0
    %258 = vmatpush2.bf16.msra.mxu0 0
    %259 = vmatprep.mubr.bf16.mxu0 0
    %260 = vmatmul.mubr.bf16.gmra.mxu0 %v177
    %v261 = vpop.f32.mrf.mxu0
    %v262 = vadd.f32 0.0, %v261
    %v263 = vpop.f32.mrf.mxu0
    %v264 = vpop.f32.mrf.mxu0
    %v265 = vadd.f32 0.0, %v264
    %v266 = vpop.f32.mrf.mxu0
    %267 = vdwg.mxu0
    %v268 = vpack.c.bf16 %v265, %v262
    %v269 = vlaneseq
    %v270 = vshrl.u32 %v269, 7
    %v271 = vsub.s32 0, %v270
    %v272 = vrot.slane %v172, %v271
    %v275 = vunpack.c.l.b16 %v54
    %v276 = vunpack.c.l.b16 %v55
    %v277 = vpack.c.b16 %v276, %v275
    %vm278 = vcmask 130048
    %v280 = vsel %vm278, %v277, 0
    %282 = vmatprep.subr.bf16.mxu0 0
    %283 = vmatpush1.bf16.msra.mxu0 0
    %284 = vmatprep.subr.bf16.mxu0 0
    %285 = vmatpush1.bf16.msra.mxu0 0
    %286 = vmatprep.subr.bf16.mxu0 0
    %287 = vmatpush1.bf16.msra.mxu0 0
    %288 = vmatprep.subr.bf16.mxu0 0
    %289 = vmatpush1.bf16.msra.mxu0 0
    %290 = vmatprep.subr.bf16.mxu0 0
    %291 = vmatpush1.bf16.msra.mxu0 0
    %292 = vmatprep.subr.bf16.mxu0 0
    %293 = vmatpush1.bf16.msra.mxu0 0
    %294 = vmatprep.subr.bf16.mxu0 0
    %295 = vmatpush1.bf16.msra.mxu0 0
    %296 = vmatprep.subr.bf16.mxu0 0
    %297 = vmatpush1.bf16.msra.mxu0 %v268
    %298 = vmatprep.subr.bf16.mxu0 0
    %299 = vmatpush2.bf16.msra.mxu0 0
    %300 = vmatprep.subr.bf16.mxu0 0
    %301 = vmatpush2.bf16.msra.mxu0 0
    %302 = vmatprep.subr.bf16.mxu0 0
    %303 = vmatpush2.bf16.msra.mxu0 0
    %304 = vmatprep.subr.bf16.mxu0 0
    %305 = vmatpush2.bf16.msra.mxu0 0
    %306 = vmatprep.subr.bf16.mxu0 0
    %307 = vmatpush2.bf16.msra.mxu0 0
    %308 = vmatprep.subr.bf16.mxu0 0
    %309 = vmatpush2.bf16.msra.mxu0 0
    %310 = vmatprep.subr.bf16.mxu0 0
    %311 = vmatpush2.bf16.msra.mxu0 0
    %312 = vmatprep.subr.bf16.mxu0 0
    %313 = vmatpush2.bf16.msra.mxu0 0
    %314 = vmatprep.mubr.bf16.mxu0 0
    %315 = vmatmul.mubr.bf16.gmra.mxu0 %v280
    %v316 = vpop.f32.mrf.mxu0
    %v317 = vadd.f32 %v272, %v316
    %v318 = vpop.f32.mrf.mxu0
    %v319 = vpop.f32.mrf.mxu0
    %v320 = vadd.f32 %v272, %v319
    %v321 = vpop.f32.mrf.mxu0
    %322 = vdwg.mxu0
    %v323 = vtanh.pop %v317
    %v324 = vtanh.pop %v320
    %v325 = vpack.c.bf16 %v324, %v323
    %v342 = vunpack.c.l.b16 %v76
    %v343 = vunpack.c.l.b16 %v77
    %v344 = vunpack.c.l.b16 %v78
    %v345 = vunpack.c.l.b16 %v79
    %v346 = vunpack.c.l.b16 %v80
    %v347 = vunpack.c.l.b16 %v81
    %v348 = vunpack.c.l.b16 %v82
    %v349 = vunpack.c.l.b16 %v83
    %v350 = vunpack.c.l.b16 %v84
    %v351 = vunpack.c.l.b16 %v85
    %v352 = vunpack.c.l.b16 %v86
    %v353 = vunpack.c.l.b16 %v87
    %v354 = vunpack.c.l.b16 %v88
    %v355 = vunpack.c.l.b16 %v89
    %v356 = vunpack.c.l.b16 %v90
    %v357 = vunpack.c.l.b16 %v91
    %v358 = vpack.c.b16 %v343, %v342
    %v359 = vpack.c.b16 %v345, %v344
    %v360 = vpack.c.b16 %v347, %v346
    %v361 = vpack.c.b16 %v349, %v348
    %v362 = vpack.c.b16 %v351, %v350
    %v363 = vpack.c.b16 %v353, %v352
    %v364 = vpack.c.b16 %v355, %v354
    %v365 = vpack.c.b16 %v357, %v356
    %374 = vmatprep.subr.bf16.mxu0 0
    %375 = vmatpush1.bf16.msra.mxu0 %v365
    %376 = vmatprep.subr.bf16.mxu0 0
    %377 = vmatpush1.bf16.msra.mxu0 %v364
    %378 = vmatprep.subr.bf16.mxu0 0
    %379 = vmatpush1.bf16.msra.mxu0 %v363
    %380 = vmatprep.subr.bf16.mxu0 0
    %381 = vmatpush1.bf16.msra.mxu0 %v362
    %382 = vmatprep.subr.bf16.mxu0 0
    %383 = vmatpush1.bf16.msra.mxu0 %v361
    %384 = vmatprep.subr.bf16.mxu0 0
    %385 = vmatpush1.bf16.msra.mxu0 %v360
    %386 = vmatprep.subr.bf16.mxu0 0
    %387 = vmatpush1.bf16.msra.mxu0 %v359
    %388 = vmatprep.subr.bf16.mxu0 0
    %389 = vmatpush1.bf16.msra.mxu0 %v358
    %390 = vmatprep.subr.bf16.mxu0 0
    %391 = vmatpush2.bf16.msra.mxu0 0
    %392 = vmatprep.subr.bf16.mxu0 0
    %393 = vmatpush2.bf16.msra.mxu0 0
    %394 = vmatprep.subr.bf16.mxu0 0
    %395 = vmatpush2.bf16.msra.mxu0 0
    %396 = vmatprep.subr.bf16.mxu0 0
    %397 = vmatpush2.bf16.msra.mxu0 0
    %398 = vmatprep.subr.bf16.mxu0 0
    %399 = vmatpush2.bf16.msra.mxu0 0
    %400 = vmatprep.subr.bf16.mxu0 0
    %401 = vmatpush2.bf16.msra.mxu0 0
    %402 = vmatprep.subr.bf16.mxu0 0
    %403 = vmatpush2.bf16.msra.mxu0 0
    %404 = vmatprep.subr.bf16.mxu0 0
    %405 = vmatpush2.bf16.msra.mxu0 0
    %406 = vmatprep.mubr.bf16.mxu0 0
    %407 = vmatmul.mubr.bf16.gmra.mxu0 %v325
    %v408 = vpop.f32.mrf.mxu0
    %v409 = vadd.f32 0.0, %v408
    %v410 = vpop.f32.mrf.mxu0
    %v411 = vpop.f32.mrf.mxu0
    %v412 = vadd.f32 0.0, %v411
    %v413 = vpop.f32.mrf.mxu0
    %414 = vdwg.mxu0
    %v415 = vpack.c.bf16 %v412, %v409
    %v416 = vlaneseq
    %v417 = vshrl.u32 %v416, 7
    %v418 = vsub.s32 1, %v417
    %v419 = vrot.slane %v172, %v418
    %420 = vmatprep.subr.bf16.mxu0 0
    %421 = vmatpush1.bf16.msra.mxu0 0
    %422 = vmatprep.subr.bf16.mxu0 0
    %423 = vmatpush1.bf16.msra.mxu0 0
    %424 = vmatprep.subr.bf16.mxu0 0
    %425 = vmatpush1.bf16.msra.mxu0 0
    %426 = vmatprep.subr.bf16.mxu0 0
    %427 = vmatpush1.bf16.msra.mxu0 0
    %428 = vmatprep.subr.bf16.mxu0 0
    %429 = vmatpush1.bf16.msra.mxu0 0
    %430 = vmatprep.subr.bf16.mxu0 0
    %431 = vmatpush1.bf16.msra.mxu0 0
    %432 = vmatprep.subr.bf16.mxu0 0
    %433 = vmatpush1.bf16.msra.mxu0 0
    %434 = vmatprep.subr.bf16.mxu0 0
    %435 = vmatpush1.bf16.msra.mxu0 %v415
    %436 = vmatprep.subr.bf16.mxu0 0
    %437 = vmatpush2.bf16.msra.mxu0 0
    %438 = vmatprep.subr.bf16.mxu0 0
    %439 = vmatpush2.bf16.msra.mxu0 0
    %440 = vmatprep.subr.bf16.mxu0 0
    %441 = vmatpush2.bf16.msra.mxu0 0
    %442 = vmatprep.subr.bf16.mxu0 0
    %443 = vmatpush2.bf16.msra.mxu0 0
    %444 = vmatprep.subr.bf16.mxu0 0
    %445 = vmatpush2.bf16.msra.mxu0 0
    %446 = vmatprep.subr.bf16.mxu0 0
    %447 = vmatpush2.bf16.msra.mxu0 0
    %448 = vmatprep.subr.bf16.mxu0 0
    %449 = vmatpush2.bf16.msra.mxu0 0
    %450 = vmatprep.subr.bf16.mxu0 0
    %451 = vmatpush2.bf16.msra.mxu0 0
    %452 = vmatprep.mubr.bf16.mxu0 0
    %453 = vmatmul.mubr.bf16.gmra.mxu0 %v280
    %v454 = vpop.f32.mrf.mxu0
    %v455 = vadd.f32 %v419, %v454
    %v456 = vpop.f32.mrf.mxu0
    %v457 = vpop.f32.mrf.mxu0
    %v458 = vadd.f32 %v419, %v457
    %v459 = vpop.f32.mrf.mxu0
    %460 = vdwg.mxu0
    %v461 = vtanh.pop %v455
    %v462 = vtanh.pop %v458
    %v463 = vpack.c.bf16 %v462, %v461
    %v465 = vsel %vm278, %v58, 0
    %467 = vmatprep.subr.bf16.mxu0 0
    %468 = vmatpush1.bf16.msra.mxu0 0
    %469 = vmatprep.subr.bf16.mxu0 0
    %470 = vmatpush1.bf16.msra.mxu0 0
    %471 = vmatprep.subr.bf16.mxu0 0
    %472 = vmatpush1.bf16.msra.mxu0 0
    %473 = vmatprep.subr.bf16.mxu0 0
    %474 = vmatpush1.bf16.msra.mxu0 0
    %475 = vmatprep.subr.bf16.mxu0 0
    %476 = vmatpush1.bf16.msra.mxu0 0
    %477 = vmatprep.subr.bf16.mxu0 0
    %478 = vmatpush1.bf16.msra.mxu0 0
    %479 = vmatprep.subr.bf16.mxu0 0
    %480 = vmatpush1.bf16.msra.mxu0 0
    %481 = vmatprep.subr.bf16.mxu0 %v463
    %482 = vmatpush1.bf16.msra.mxu0 %v325
    %483 = vmatprep.subr.bf16.mxu0 0
    %484 = vmatpush2.bf16.msra.mxu0 0
    %485 = vmatprep.subr.bf16.mxu0 0
    %486 = vmatpush2.bf16.msra.mxu0 0
    %487 = vmatprep.subr.bf16.mxu0 0
    %488 = vmatpush2.bf16.msra.mxu0 0
    %489 = vmatprep.subr.bf16.mxu0 0
    %490 = vmatpush2.bf16.msra.mxu0 0
    %491 = vmatprep.subr.bf16.mxu0 0
    %492 = vmatpush2.bf16.msra.mxu0 0
    %493 = vmatprep.subr.bf16.mxu0 0
    %494 = vmatpush2.bf16.msra.mxu0 0
    %495 = vmatprep.subr.bf16.mxu0 0
    %496 = vmatpush2.bf16.msra.mxu0 0
    %497 = vmatprep.subr.bf16.mxu0 0
    %498 = vmatpush2.bf16.msra.mxu0 0
    %499 = vmatprep.mubr.bf16.mxu0 0
    %500 = vmatmul.mubr.bf16.gmra.mxu0 %v465
    %v501 = vpop.f32.mrf.mxu0
    %v502 = vadd.f32 0.0, %v501
    %v503 = vpop.f32.mrf.mxu0
    %v504 = vadd.f32 0.0, %v503
    %v505 = vpop.f32.mrf.mxu0
    %v506 = vpop.f32.mrf.mxu0
    %507 = vdwg.mxu0
    %v508 = vpack.c.bf16 %v502, %v502
    %v509 = vpack.c.bf16 %v504, %v504
    %v510 = vlaneseq
    %v511 = vshrl.u32 %v510, 7
    %v512 = vsub.s32 2, %v511
    %v513 = vrot.slane %v172, %v512
    %v546 = vunpack.c.l.b16 %v92
    %v547 = vunpack.c.l.b16 %v93
    %v548 = vunpack.c.l.b16 %v94
    %v549 = vunpack.c.l.b16 %v95
    %v550 = vunpack.c.l.b16 %v96
    %v551 = vunpack.c.l.b16 %v97
    %v552 = vunpack.c.l.b16 %v98
    %v553 = vunpack.c.l.b16 %v99
    %v554 = vunpack.c.l.b16 %v100
    %v555 = vunpack.c.l.b16 %v101
    %v556 = vunpack.c.l.b16 %v102
    %v557 = vunpack.c.l.b16 %v103
    %v558 = vunpack.c.l.b16 %v104
    %v559 = vunpack.c.l.b16 %v105
    %v560 = vunpack.c.l.b16 %v106
    %v561 = vunpack.c.l.b16 %v107
    %v562 = vunpack.c.l.b16 %v108
    %v563 = vunpack.c.l.b16 %v109
    %v564 = vunpack.c.l.b16 %v110
    %v565 = vunpack.c.l.b16 %v111
    %v566 = vunpack.c.l.b16 %v112
    %v567 = vunpack.c.l.b16 %v113
    %v568 = vunpack.c.l.b16 %v114
    %v569 = vunpack.c.l.b16 %v115
    %v570 = vunpack.c.l.b16 %v116
    %v571 = vunpack.c.l.b16 %v117
    %v572 = vunpack.c.l.b16 %v118
    %v573 = vunpack.c.l.b16 %v119
    %v574 = vunpack.c.l.b16 %v120
    %v575 = vunpack.c.l.b16 %v121
    %v576 = vunpack.c.l.b16 %v122
    %v577 = vunpack.c.l.b16 %v123
    %v578 = vpack.c.b16 %v547, %v546
    %v579 = vpack.c.b16 %v549, %v548
    %v580 = vpack.c.b16 %v551, %v550
    %v581 = vpack.c.b16 %v553, %v552
    %v582 = vpack.c.b16 %v555, %v554
    %v583 = vpack.c.b16 %v557, %v556
    %v584 = vpack.c.b16 %v559, %v558
    %v585 = vpack.c.b16 %v561, %v560
    %v586 = vpack.c.b16 %v563, %v562
    %v587 = vpack.c.b16 %v565, %v564
    %v588 = vpack.c.b16 %v567, %v566
    %v589 = vpack.c.b16 %v569, %v568
    %v590 = vpack.c.b16 %v571, %v570
    %v591 = vpack.c.b16 %v573, %v572
    %v592 = vpack.c.b16 %v575, %v574
    %v593 = vpack.c.b16 %v577, %v576
    %610 = vmatprep.subr.bf16.mxu0 0
    %611 = vmatpush1.bf16.msra.mxu0 %v585
    %612 = vmatprep.subr.bf16.mxu0 0
    %613 = vmatpush1.bf16.msra.mxu0 %v584
    %614 = vmatprep.subr.bf16.mxu0 0
    %615 = vmatpush1.bf16.msra.mxu0 %v583
    %616 = vmatprep.subr.bf16.mxu0 0
    %617 = vmatpush1.bf16.msra.mxu0 %v582
    %618 = vmatprep.subr.bf16.mxu0 0
    %619 = vmatpush1.bf16.msra.mxu0 %v581
    %620 = vmatprep.subr.bf16.mxu0 0
    %621 = vmatpush1.bf16.msra.mxu0 %v580
    %622 = vmatprep.subr.bf16.mxu0 0
    %623 = vmatpush1.bf16.msra.mxu0 %v579
    %624 = vmatprep.subr.bf16.mxu0 0
    %625 = vmatpush1.bf16.msra.mxu0 %v578
    %626 = vmatprep.subr.bf16.mxu0 0
    %627 = vmatpush2.bf16.msra.mxu0 %v593
    %628 = vmatprep.subr.bf16.mxu0 0
    %629 = vmatpush2.bf16.msra.mxu0 %v592
    %630 = vmatprep.subr.bf16.mxu0 0
    %631 = vmatpush2.bf16.msra.mxu0 %v591
    %632 = vmatprep.subr.bf16.mxu0 0
    %633 = vmatpush2.bf16.msra.mxu0 %v590
    %634 = vmatprep.subr.bf16.mxu0 0
    %635 = vmatpush2.bf16.msra.mxu0 %v589
    %636 = vmatprep.subr.bf16.mxu0 0
    %637 = vmatpush2.bf16.msra.mxu0 %v588
    %638 = vmatprep.subr.bf16.mxu0 0
    %639 = vmatpush2.bf16.msra.mxu0 %v587
    %640 = vmatprep.subr.bf16.mxu0 0
    %641 = vmatpush2.bf16.msra.mxu0 %v586
    %642 = vmatprep.mubr.bf16.mxu0 %v509
    %643 = vmatmul.mubr.bf16.gmra.mxu0 %v508
    %v644 = vpop.f32.mrf.mxu0
    %v645 = vadd.f32 %v513, %v644
    %v646 = vpop.f32.mrf.mxu0
    %v647 = vpop.f32.mrf.mxu0
    %v648 = vpop.f32.mrf.mxu0
    %649 = vdwg.mxu0
    %v650 = vlaneseq
    %v651 = vshrl.u32 %v650, 7
    %v652 = vsub.s32 3, %v651
    %v653 = vrot.slane %v172, %v652
    %v670 = vunpack.c.l.b16 %v124
    %v671 = vunpack.c.l.b16 %v125
    %v672 = vunpack.c.l.b16 %v126
    %v673 = vunpack.c.l.b16 %v127
    %v674 = vunpack.c.l.b16 %v128
    %v675 = vunpack.c.l.b16 %v129
    %v676 = vunpack.c.l.b16 %v130
    %v677 = vunpack.c.l.b16 %v131
    %v678 = vunpack.c.l.b16 %v132
    %v679 = vunpack.c.l.b16 %v133
    %v680 = vunpack.c.l.b16 %v134
    %v681 = vunpack.c.l.b16 %v135
    %v682 = vunpack.c.l.b16 %v136
    %v683 = vunpack.c.l.b16 %v137
    %v684 = vunpack.c.l.b16 %v138
    %v685 = vunpack.c.l.b16 %v139
    %v686 = vpack.c.b16 %v671, %v670
    %v687 = vpack.c.b16 %v673, %v672
    %v688 = vpack.c.b16 %v675, %v674
    %v689 = vpack.c.b16 %v677, %v676
    %v690 = vpack.c.b16 %v679, %v678
    %v691 = vpack.c.b16 %v681, %v680
    %v692 = vpack.c.b16 %v683, %v682
    %v693 = vpack.c.b16 %v685, %v684
    %702 = vmatprep.subr.bf16.mxu0 0
    %703 = vmatpush1.bf16.msra.mxu0 %v693
    %704 = vmatprep.subr.bf16.mxu0 0
    %705 = vmatpush1.bf16.msra.mxu0 %v692
    %706 = vmatprep.subr.bf16.mxu0 0
    %707 = vmatpush1.bf16.msra.mxu0 %v691
    %708 = vmatprep.subr.bf16.mxu0 0
    %709 = vmatpush1.bf16.msra.mxu0 %v690
    %710 = vmatprep.subr.bf16.mxu0 0
    %711 = vmatpush1.bf16.msra.mxu0 %v689
    %712 = vmatprep.subr.bf16.mxu0 0
    %713 = vmatpush1.bf16.msra.mxu0 %v688
    %714 = vmatprep.subr.bf16.mxu0 0
    %715 = vmatpush1.bf16.msra.mxu0 %v687
    %716 = vmatprep.subr.bf16.mxu0 0
    %717 = vmatpush1.bf16.msra.mxu0 %v686
    %718 = vmatprep.subr.bf16.mxu0 0
    %719 = vmatpush2.bf16.msra.mxu0 0
    %720 = vmatprep.subr.bf16.mxu0 0
    %721 = vmatpush2.bf16.msra.mxu0 0
    %722 = vmatprep.subr.bf16.mxu0 0
    %723 = vmatpush2.bf16.msra.mxu0 0
    %724 = vmatprep.subr.bf16.mxu0 0
    %725 = vmatpush2.bf16.msra.mxu0 0
    %726 = vmatprep.subr.bf16.mxu0 0
    %727 = vmatpush2.bf16.msra.mxu0 0
    %728 = vmatprep.subr.bf16.mxu0 0
    %729 = vmatpush2.bf16.msra.mxu0 0
    %730 = vmatprep.subr.bf16.mxu0 0
    %731 = vmatpush2.bf16.msra.mxu0 0
    %732 = vmatprep.subr.bf16.mxu0 0
    %733 = vmatpush2.bf16.msra.mxu0 0
    %734 = vmatprep.mubr.bf16.mxu0 0
    %735 = vmatmul.mubr.bf16.gmra.mxu0 %v59
    %v736 = vpop.f32.mrf.mxu0
    %v737 = vadd.f32 %v653, %v736
    %v738 = vpop.f32.mrf.mxu0
    %v739 = vpop.f32.mrf.mxu0
    %v740 = vpop.f32.mrf.mxu0
    %741 = vdwg.mxu0
    %v742 = vmax.f32 %v737, 0.0
    %v743 = vmax.f32 %v645, 0.0
    %v744 = vpack.c.bf16 %v742, %v742
    %v745 = vpack.c.bf16 %v743, %v743
    %v746 = vlaneseq
    %v747 = vshrl.u32 %v746, 7
    %v748 = vsub.s32 4, %v747
    %v749 = vrot.slane %v172, %v748
    %v782 = vunpack.c.l.b16 %v140
    %v783 = vunpack.c.l.b16 %v141
    %v784 = vunpack.c.l.b16 %v142
    %v785 = vunpack.c.l.b16 %v143
    %v786 = vunpack.c.l.b16 %v144
    %v787 = vunpack.c.l.b16 %v145
    %v788 = vunpack.c.l.b16 %v146
    %v789 = vunpack.c.l.b16 %v147
    %v790 = vunpack.c.l.b16 %v148
    %v791 = vunpack.c.l.b16 %v149
    %v792 = vunpack.c.l.b16 %v150
    %v793 = vunpack.c.l.b16 %v151
    %v794 = vunpack.c.l.b16 %v152
    %v795 = vunpack.c.l.b16 %v153
    %v796 = vunpack.c.l.b16 %v154
    %v797 = vunpack.c.l.b16 %v155
    %v798 = vunpack.c.l.b16 %v156
    %v799 = vunpack.c.l.b16 %v157
    %v800 = vunpack.c.l.b16 %v158
    %v801 = vunpack.c.l.b16 %v159
    %v802 = vunpack.c.l.b16 %v160
    %v803 = vunpack.c.l.b16 %v161
    %v804 = vunpack.c.l.b16 %v162
    %v805 = vunpack.c.l.b16 %v163
    %v806 = vunpack.c.l.b16 %v164
    %v807 = vunpack.c.l.b16 %v165
    %v808 = vunpack.c.l.b16 %v166
    %v809 = vunpack.c.l.b16 %v167
    %v810 = vunpack.c.l.b16 %v168
    %v811 = vunpack.c.l.b16 %v169
    %v812 = vunpack.c.l.b16 %v170
    %v813 = vunpack.c.l.b16 %v171
    %v814 = vpack.c.b16 %v783, %v782
    %v815 = vpack.c.b16 %v785, %v784
    %v816 = vpack.c.b16 %v787, %v786
    %v817 = vpack.c.b16 %v789, %v788
    %v818 = vpack.c.b16 %v791, %v790
    %v819 = vpack.c.b16 %v793, %v792
    %v820 = vpack.c.b16 %v795, %v794
    %v821 = vpack.c.b16 %v797, %v796
    %v822 = vpack.c.b16 %v799, %v798
    %v823 = vpack.c.b16 %v801, %v800
    %v824 = vpack.c.b16 %v803, %v802
    %v825 = vpack.c.b16 %v805, %v804
    %v826 = vpack.c.b16 %v807, %v806
    %v827 = vpack.c.b16 %v809, %v808
    %v828 = vpack.c.b16 %v811, %v810
    %v829 = vpack.c.b16 %v813, %v812
    %846 = vmatprep.subr.bf16.mxu0 0
    %847 = vmatpush1.bf16.msra.mxu0 %v821
    %848 = vmatprep.subr.bf16.mxu0 0
    %849 = vmatpush1.bf16.msra.mxu0 %v820
    %850 = vmatprep.subr.bf16.mxu0 0
    %851 = vmatpush1.bf16.msra.mxu0 %v819
    %852 = vmatprep.subr.bf16.mxu0 0
    %853 = vmatpush1.bf16.msra.mxu0 %v818
    %854 = vmatprep.subr.bf16.mxu0 0
    %855 = vmatpush1.bf16.msra.mxu0 %v817
    %856 = vmatprep.subr.bf16.mxu0 0
    %857 = vmatpush1.bf16.msra.mxu0 %v816
    %858 = vmatprep.subr.bf16.mxu0 0
    %859 = vmatpush1.bf16.msra.mxu0 %v815
    %860 = vmatprep.subr.bf16.mxu0 0
    %861 = vmatpush1.bf16.msra.mxu0 %v814
    %862 = vmatprep.subr.bf16.mxu0 0
    %863 = vmatpush2.bf16.msra.mxu0 %v829
    %864 = vmatprep.subr.bf16.mxu0 0
    %865 = vmatpush2.bf16.msra.mxu0 %v828
    %866 = vmatprep.subr.bf16.mxu0 0
    %867 = vmatpush2.bf16.msra.mxu0 %v827
    %868 = vmatprep.subr.bf16.mxu0 0
    %869 = vmatpush2.bf16.msra.mxu0 %v826
    %870 = vmatprep.subr.bf16.mxu0 0
    %871 = vmatpush2.bf16.msra.mxu0 %v825
    %872 = vmatprep.subr.bf16.mxu0 0
    %873 = vmatpush2.bf16.msra.mxu0 %v824
    %874 = vmatprep.subr.bf16.mxu0 0
    %875 = vmatpush2.bf16.msra.mxu0 %v823
    %876 = vmatprep.subr.bf16.mxu0 0
    %877 = vmatpush2.bf16.msra.mxu0 %v822
    %878 = vmatprep.mubr.bf16.mxu0 %v745
    %879 = vmatmul.mubr.bf16.gmra.mxu0 %v744
    %v880 = vpop.f32.mrf.mxu0
    %v881 = vadd.f32 %v749, %v880
    %v882 = vpop.f32.mrf.mxu0
    %v883 = vpop.f32.mrf.mxu0
    %v884 = vpop.f32.mrf.mxu0
    %885 = vdwg.mxu0
    %v886 = vsub.f32 0.0, %v881
    %v887 = vmul.f32 %v886, 1.442695
    %v888 = vpow.pop %v887
    %v889 = vadd.f32 %v888, 1.0
    %v890 = vrcp.pop %v889
    %v891 = vlaneseq
    %v892 = vand.u32 %v891, 127
    %vm893 = vcmp.ge.s32.totalorder %v892, 32
    %vm894 = vcmp.lt.s32.totalorder %v892, 35
    %vm895 = vmand %vm893, %vm894
    %v896 = vsel %vm895, %v890, %v743
    %897 = vst [vmem:[%s3] sm:$0xff] %v896
    // Predicated region
    $region26: #{forward_and_loss.1} parent=1 // pred_check
      _
    $region27: #{forward_and_loss.1} parent=1 // pred_check_branch
      %899 = sbr.rel (0) target = $region29
    $region28: #{forward_and_loss.1} parent=1 // pred_region
      _
    $region29: #{forward_and_loss.1} parent=1 // pred_fallthru
      _
    // Predicated region
    $region30: #{forward_and_loss.1} parent=1 // pred_check
      _
    $region31: #{forward_and_loss.1} parent=1 // pred_check_branch
      %901 = sbr.rel (0) target = $region33
    $region32: #{forward_and_loss.1} parent=1 // pred_region
      _
    $region33: #{forward_and_loss.1} parent=1 // pred_fallthru
      _
    %902 = vsyncpa [#allocation3], 1
    %903 = vsyncpa [#allocation5], 1

</llo_original>
